<compile_context>
chip_gen: v7x
topology: tpu7x:2x2x1
jax: 0.10.0
libtpu: 0.0.40
codegen_flags: <defaults>
</compile_context>

<pallas_src>
import functools

import jax
import jax.numpy as jnp
from jax import lax
from jax.experimental import pallas as pl
from jax.experimental.pallas import tpu as pltpu


def _focal_loss_kernel(logits_ref, target_ref, out_ref, *, alpha, gamma, n_total):
    i = pl.program_id(0)
    x = logits_ref[...].astype(jnp.float32)       # (TILE_N, C): f32 math in-kernel
    t = target_ref[...]                           # (TILE_N, 1) int32
    tile_n, c = x.shape

    # Numerically-stable softmax pieces (reductions along the lane/class axis).
    m = jnp.max(x, axis=-1, keepdims=True)                               # (TILE_N, 1)
    xm = x - m                                                           # (TILE_N, C)
    e = jnp.exp(xm)                                                      # (TILE_N, C)
    sum_e = jnp.sum(e, axis=-1, keepdims=True)                           # (TILE_N, 1)

    # Gather (target_logit - m) per row via a lane-iota mask (no dynamic gather
    # on TPU).  Gathering from xm (not x) lets ce/pt reuse it directly.
    col = lax.broadcasted_iota(jnp.int32, (tile_n, c), 1)                # (TILE_N, C)
    g = jnp.sum(jnp.where(col == t, xm, 0.0), axis=-1, keepdims=True)    # (TILE_N, 1)

    ce = jnp.log(sum_e) - g                                              # per-row CE
    # pt = softmax prob of the target class = exp(tgt - m) / sum_e.
    pt = jnp.exp(g) * pl.reciprocal(sum_e, approx=True)
    focal = alpha * (1.0 - pt) ** gamma * ce      # gamma static int -> VPU multiplies

    # Mask rows past the true batch size (ragged last tile reads padded garbage;
    # the select drops any NaN/Inf those rows may have produced).
    row = lax.broadcasted_iota(jnp.int32, (tile_n, 1), 0) + i * tile_n
    focal = jnp.where(row < n_total, focal, 0.0)

    # Lane-dense per-tile partial sum: full (1, 8, 128) unmasked vreg store.
    partial = jnp.sum(focal)
    out_ref[...] = jnp.broadcast_to(partial, out_ref.shape).astype(jnp.float32)


def _round_down(x, m):
    return (x // m) * m


def _vmem_profile():
    """(tile_budget_bytes, vmem_limit_bytes) chosen per TPU generation."""
    try:
        info = pltpu.get_tpu_info()
        vmem = int(getattr(info, "vmem_capacity_bytes", 0) or 0)
    except Exception:  # not on TPU / query unavailable -> conservative defaults
        vmem = 0
    if vmem >= 100 * 1024 * 1024:
        # v5e / v6e class parts: 128 MiB physical VMEM -> big blocks, 64 MiB limit.
        return 40 * 1024 * 1024, 64 * 1024 * 1024
    # v7x (64 MiB per TensorCore) or unknown: stay under the 32 MiB scoped limit.
    return 18 * 1024 * 1024, 32 * 1024 * 1024


def _choose_tile_n(n, c, itemsize, tile_budget_bytes):
    """Row tile sized from a whole-kernel VMEM budget, sublane-aligned, and
    guaranteeing a multi-step grid so the pipeline / both v7x cores get work."""
    sublane = 8 if itemsize >= 4 else (16 if itemsize == 2 else 32)
    # Per-row VMEM estimate:
    #   2x double-buffered native-dtype logits block
    # + 2x double-buffered (TILE_N, 1) int32 target block (lane-padded to 128)
    # + ~5 full-tile f32 intermediates (upcast x, xm, e, col iota, masked select)
    per_row = 2 * c * itemsize + 2 * 128 * 4 + 5 * c * 4
    cap = max(sublane, _round_down(tile_budget_bytes // per_row, sublane))
    cap = min(cap, 8192)
    if n <= sublane:
        return n                 # can't split below sublane granularity
    # Aim for >= 4 grid steps (steady-state double buffering, and >= 2 tiles so
    # dimension_semantics=("parallel",) can shard across v7x's two TensorCores).
    want = max(sublane, _round_down(pl.cdiv(n, 4), sublane))
    return min(cap, want)


def focal_loss(logits, target, alpha=0.25, gamma=2, *, tile_n=None):
    """logits: (N, C) float (f32/bf16, kept in native dtype); target: (N,) class ids."""
    n, c = logits.shape
    tile_budget, vmem_limit = _vmem_profile()
    if tile_n is None:
        tile_n = _choose_tile_n(n, c, logits.dtype.itemsize, tile_budget)
    num_tiles = pl.cdiv(n, tile_n)

    # (N, 1) int32 targets: the sublane-strided DMA delivers them already in
    # column orientation (what the lane-iota mask needs); its padded VMEM cost
    # is charged to the tile budget above.
    target2d = target.astype(jnp.int32).reshape(n, 1)

    kernel = functools.partial(
        _focal_loss_kernel, alpha=float(alpha), gamma=gamma, n_total=n)

    partials = pl.pallas_call(
        kernel,
        out_shape=jax.ShapeDtypeStruct((num_tiles, 8, 128), jnp.float32),
        grid=(num_tiles,),
        in_specs=[
            pl.BlockSpec((tile_n, c), lambda i: (i, 0)),
            pl.BlockSpec((tile_n, 1), lambda i: (i, 0)),
        ],
        out_specs=pl.BlockSpec((1, 8, 128), lambda i: (i, 0, 0)),
        compiler_params=pltpu.CompilerParams(
            dimension_semantics=("parallel",),
            vmem_limit_bytes=vmem_limit,
        ),
    )(logits, target2d)

    # Final mean over the true batch size; 1/N is a trace-time constant.
    return jnp.sum(partials[:, 0, 0]) * jnp.float32(1.0 / n)


def focal_loss_ref(logits, target, alpha=0.25, gamma=2):
    # pure-JAX reference (mirrors F.cross_entropy + focal weighting)
    logp = jax.nn.log_softmax(logits.astype(jnp.float32), axis=-1)
    ce = -jnp.take_along_axis(logp, target[:, None].astype(jnp.int32), axis=-1)[:, 0]
    pt = jnp.exp(-ce)
    return jnp.mean(alpha * (1.0 - pt) ** gamma * ce)


if __name__ == "__main__":
    key = jax.random.PRNGKey(0)
    k1, k2, k3, k4, k5, k6 = jax.random.split(key, 6)

    # 1) tiny single-tile case (f32 logits, module defaults)
    N, C = 8, 32
    logits = jax.random.normal(k1, (N, C), dtype=jnp.float32)
    target = jax.random.randint(k2, (N,), 0, C, dtype=jnp.int32)
    out = focal_loss(logits, target)
    jax.block_until_ready(out)
    ref = focal_loss_ref(logits, target)
    assert jnp.allclose(out, ref, atol=1e-5, rtol=2e-3), (out, ref)

    # 2) auto tile selection -> multi-step grid (>=4 steps) + ragged last tile
    N2, C2 = 200, 48
    logits2 = jax.random.normal(k3, (N2, C2), dtype=jnp.float32)
    target2 = jax.random.randint(k4, (N2,), 0, C2, dtype=jnp.int32)
    out2 = focal_loss(logits2, target2)
    jax.block_until_ready(out2)
    ref2 = focal_loss_ref(logits2, target2)
    assert jnp.allclose(out2, ref2, atol=1e-5, rtol=2e-3), (out2, ref2)

    # 3) native bf16 logits with an explicit tile override (f32 math in-kernel)
    logits_bf16 = logits2.astype(jnp.bfloat16)
    out3 = focal_loss(logits_bf16, target2, tile_n=64)
    jax.block_until_ready(out3)
    ref3 = focal_loss_ref(logits_bf16, target2)
    assert jnp.allclose(out3, ref3, atol=1e-4, rtol=5e-3), (out3, ref3)

    # 4) slightly larger auto-tiled f32 case (exercises the 4-step steady state)
    N4, C4 = 1024, 32
    logits4 = jax.random.normal(k5, (N4, C4), dtype=jnp.float32)
    target4 = jax.random.randint(k6, (N4,), 0, C4, dtype=jnp.int32)
    out4 = focal_loss(logits4, target4)
    jax.block_until_ready(out4)
    ref4 = focal_loss_ref(logits4, target4)
    assert jnp.allclose(out4, ref4, atol=1e-5, rtol=2e-3), (out4, ref4)

    print("KERNEL_OK")
</pallas_src>

<mosaic_0001>
module attributes {stable_mosaic.version = 11 : i64} {
  func.func @_focal_loss_kernel(%arg0: i32, %arg1: memref<8x32xf32, #tpu.memory_space<vmem>>, %arg2: memref<8x1xi32, #tpu.memory_space<vmem>>, %arg3: memref<1x8x128xf32, #tpu.memory_space<vmem>>) attributes {dimension_semantics = [#tpu.dimension_semantics<parallel>], iteration_bounds = array<i64: 1>, scalar_prefetch = 0 : i64, scratch_operands = 0 : i64, tpu.core_type = #tpu.core_type<tc>, window_params = [{transform_indices = @transform_0, window_bounds = array<i64: 8, 32>}, {transform_indices = @transform_1, window_bounds = array<i64: 8, 1>}, {transform_indices = @transform_2, window_bounds = array<i64: 1, 8, 128>}]} {
    %c0 = arith.constant 0 : index
    %c0_0 = arith.constant 0 : index
    %0 = vector.load %arg1[%c0, %c0_0] : memref<8x32xf32, #tpu.memory_space<vmem>>, vector<8x32xf32>
    %c0_1 = arith.constant 0 : index
    %c0_2 = arith.constant 0 : index
    %1 = vector.load %arg2[%c0_1, %c0_2] : memref<8x1xi32, #tpu.memory_space<vmem>>, vector<8x1xi32>
    %cst = arith.constant dense<0xFF800000> : vector<8xf32>
    %2 = vector.multi_reduction <maximumf>, %0, %cst [1] : vector<8x32xf32> to vector<8xf32>
    %3 = vector.shape_cast %2 : vector<8xf32> to vector<8x1xf32>
    %4 = vector.broadcast %3 : vector<8x1xf32> to vector<8x32xf32>
    %5 = arith.subf %0, %4 : vector<8x32xf32>
    %6 = math.exp %5 : vector<8x32xf32>
    %cst_3 = arith.constant dense<0.000000e+00> : vector<8xf32>
    %7 = vector.multi_reduction <add>, %6, %cst_3 [1] : vector<8x32xf32> to vector<8xf32>
    %8 = vector.shape_cast %7 : vector<8xf32> to vector<8x1xf32>
    %9 = tpu.iota {dimensions = array<i32: 1>} : vector<8x32xi32>
    %10 = vector.broadcast %1 : vector<8x1xi32> to vector<8x32xi32>
    %11 = arith.cmpi eq, %9, %10 : vector<8x32xi32>
    %cst_4 = arith.constant 0.000000e+00 : f32
    %12 = vector.broadcast %cst_4 : f32 to vector<8x32xf32>
    %13 = arith.select %11, %5, %12 : vector<8x32xi1>, vector<8x32xf32>
    %cst_5 = arith.constant dense<0.000000e+00> : vector<8xf32>
    %14 = vector.multi_reduction <add>, %13, %cst_5 [1] : vector<8x32xf32> to vector<8xf32>
    %15 = vector.shape_cast %14 : vector<8xf32> to vector<8x1xf32>
    %16 = math.log %8 : vector<8x1xf32>
    %17 = arith.subf %16, %15 : vector<8x1xf32>
    %18 = math.exp %15 : vector<8x1xf32>
    %19 = tpu.reciprocal %8 {approx = true} : vector<8x1xf32> -> vector<8x1xf32>
    %20 = arith.mulf %18, %19 : vector<8x1xf32>
    %cst_6 = arith.constant 1.000000e+00 : f32
    %21 = vector.broadcast %cst_6 : f32 to vector<8x1xf32>
    %22 = arith.subf %21, %20 : vector<8x1xf32>
    %23 = arith.mulf %22, %22 : vector<8x1xf32>
    %cst_7 = arith.constant 2.500000e-01 : f32
    %24 = vector.broadcast %cst_7 : f32 to vector<8x1xf32>
    %25 = arith.mulf %24, %23 : vector<8x1xf32>
    %26 = arith.mulf %25, %17 : vector<8x1xf32>
    %27 = tpu.iota {dimensions = array<i32: 0>} : vector<8x1xi32>
    %c8_i32 = arith.constant 8 : i32
    %28 = arith.muli %arg0, %c8_i32 : i32
    %29 = vector.broadcast %28 : i32 to vector<8x1xi32>
    %30 = arith.addi %27, %29 : vector<8x1xi32>
    %c8_i32_8 = arith.constant 8 : i32
    %31 = vector.broadcast %c8_i32_8 : i32 to vector<8x1xi32>
    %32 = arith.cmpi slt, %30, %31 : vector<8x1xi32>
    %cst_9 = arith.constant 0.000000e+00 : f32
    %33 = vector.broadcast %cst_9 : f32 to vector<8x1xf32>
    %34 = arith.select %32, %26, %33 : vector<8x1xi1>, vector<8x1xf32>
    %35 = vector.shape_cast %34 : vector<8x1xf32> to vector<1x8x1xf32>
    %cst_10 = arith.constant dense<0.000000e+00> : vector<1xf32>
    %36 = vector.multi_reduction <add>, %35, %cst_10 [1, 2] : vector<1x8x1xf32> to vector<1xf32>
    %37 = vector.shape_cast %36 : vector<1xf32> to vector<1x1x1xf32>
    %38 = vector.extract %37[0, 0, 0] : f32 from vector<1x1x1xf32>
    %39 = vector.broadcast %38 : f32 to vector<1x8x128xf32>
    %c0_11 = arith.constant 0 : index
    %c0_12 = arith.constant 0 : index
    %c0_13 = arith.constant 0 : index
    %40 = vector.load %arg3[%c0_11, %c0_12, %c0_13] : memref<1x8x128xf32, #tpu.memory_space<vmem>>, vector<1x8x128xf32>
    tpu.vector_store %arg3[%c0_11, %c0_12, %c0_13], %39 {strides = array<i32>} : memref<1x8x128xf32, #tpu.memory_space<vmem>>, vector<1x8x128xf32>,
    return
  }
  func.func @transform_0(%arg0: i32) -> (i32, i32) {
    %c0_i32 = arith.constant 0 : i32
    %c0_i32_0 = arith.constant 0 : i32
    return %arg0, %c0_i32 : i32, i32
  }
  func.func @transform_1(%arg0: i32) -> (i32, i32) {
    %c0_i32 = arith.constant 0 : i32
    %c0_i32_0 = arith.constant 0 : i32
    return %arg0, %c0_i32 : i32, i32
  }
  func.func @transform_2(%arg0: i32) -> (i32, i32, i32) {
    %c0_i32 = arith.constant 0 : i32
    %c0_i32_0 = arith.constant 0 : i32
    %c0_i32_1 = arith.constant 0 : i32
    return %arg0, %c0_i32, %c0_i32_0 : i32, i32, i32
  }
}

</mosaic_0001>

<llo_original>
// kernel: tpu_custom_call.1
$region0: #{tpu_custom_call.1}
  #allocation0 [shape = 'u32[]', space=smem, size = 0x4, offset = 0x4, fixed_abs, tag = 'smem constant byte address 0x4 - core index']
  #allocation1 [shape = 'u32[144,128]{1,0:T(1,128)}', space=vmem, size = 0x12000, scoped, tag = 'internal scratch']
  %s0 = inlined_call_operand.vmem [shape: f32[8,32], index: 0, kind: input, shape index: {}]
  %s1 = inlined_call_operand.vmem [shape: s32[8,1], index: 1, kind: input, shape index: {}]
  %s2 = inlined_call_operand.hbm [shape: f32[1,8,128], index: 2, kind: output, shape index: {}]
  %s3 = sld [smem:[#allocation0]]
  $region18: #{tpu_custom_call.1} parent=0
    _
  %s5 = ssub.s32 1, %s3
  %s6 = scalar_select 0, %s5, %s3
  $region1: #{tpu_custom_call.1} parent=0
    #allocation2 [shape = 'u8[4096]{0}', space=vmem, size = 0x1000, scoped, tag = 'output window, operand 0, single buffered']
    #allocation3 [shape = 's32[1]{0}', space=sflag, size = 0x4, scoped, tag = 'scoped memory for tpu_custom_call.1']
    %7 = vsyncpa [#allocation3], 0
    // Predicated region
    $region2: #{tpu_custom_call.1} parent=1 // pred_check
      _
    $region3: #{tpu_custom_call.1} parent=1 // pred_check_branch
      %9 = sbr.rel (0) target = $region5
    $region4: #{tpu_custom_call.1} parent=1 // pred_region
      _
    $region5: #{tpu_custom_call.1} parent=1 // pred_fallthru
      _
    // Predicated region
    $region6: #{tpu_custom_call.1} parent=1 // pred_check
      _
    $region7: #{tpu_custom_call.1} parent=1 // pred_check_branch
      %11 = sbr.rel (0) target = $region9
    $region8: #{tpu_custom_call.1} parent=1 // pred_region
      _
    $region9: #{tpu_custom_call.1} parent=1 // pred_fallthru
      _
    %v12 = vld [vmem:[%s0] sm:$0xff]
    %v13 = vld [vmem:[%s1] sm:$0xff]
    %vm14 = vcmask 261120
    %v15 = vsel %vm14, %v12, -inf
    %16 = vmax.xlane.f32.xlu0 %v15
    %v17 = vpop.xlane.xlu0 %16
    %v18 = vsub.f32 %v12, %v17
    %v19 = vmul.f32 %v18, 1.442695
    %v20 = vpow.pop %v19
    %v21 = vsel %vm14, %v20, 0.0
    %22 = vadd.xlane.f32.xlu0 %v21
    %v23 = vpop.xlane.xlu0 %22
    %v24 = vlaneseq
    %v25 = vand.u32 %v24, 127
    %26 = vset.pattern.permute.xlu0 0
    %27 = vperm.xlu0 %26, %v13
    %v28 = vpop.permute.xlu0 %27
    %vm29 = vcmp.eq.s32.totalorder %v25, %v28
    %v30 = vsel %vm29, %v18, 0.0
    %v31 = vsel %vm14, %v30, 0.0
    %32 = vadd.xlane.f32.xlu0 %v31
    %v33 = vpop.xlane.xlu0 %32
    %v34 = vlog2.pop %v23
    %v35 = vmul.f32 %v34, 0.6931472
    %v36 = vsub.f32 %v35, %v33
    %v37 = vmul.f32 %v33, 1.442695
    %v38 = vpow.pop %v37
    %v39 = vrcp.pop %v23
    %v40 = vmul.f32 %v38, %v39
    %v41 = vsub.f32 1.0, %v40
    %v42 = vmul.f32 %v41, %v41
    %v43 = vmul.f32 %v42, 0.25
    %v44 = vmul.f32 %v43, %v36
    %v45 = vlaneseq
    %v46 = vshrl.u32 %v45, 7
    %s47 = smul.u32 0, 8
    %v48 = vstv %s47
    %v49 = vadd.s32 %v46, %v48
    %vm50 = vcmp.lt.s32.totalorder %v49, 8
    %v51 = vsel %vm50, %v44, 0.0
    %vm52 = vcmask 7168
    %v53 = vsel %vm52, %v51, 0.0
    %54 = vadd.xlane.f32.xlu0 %v53
    %v55 = vpop.xlane.xlu0 %54
    %v56 = vrot.slane %v55, 4
    %v57 = vadd.f32 %v55, %v56
    %v58 = vrot.slane %v57, 2
    %v59 = vadd.f32 %v57, %v58
    %v60 = vrot.slane %v59, 1
    %v61 = vadd.f32 %v59, %v60
    %s62 = vtos %v61
    %v63 = vstv %s62
    %64 = vst [vmem:[#allocation2] sm:$0xff] %v63
    // Predicated region
    $region10: #{tpu_custom_call.1} parent=1 // pred_check
      _
    $region11: #{tpu_custom_call.1} parent=1 // pred_check_branch
      %66 = sbr.rel (0) target = $region13
    $region12: #{tpu_custom_call.1} parent=1 // pred_region
      %s68 = ssub.s32 128, 128
      %69 = vsyncadd [#allocation3], %s68
      %s71 = sshll.u32 [#allocation2], 4
      %s72 = int_to_ptr.vmem [resolvable:$true] %s71
      %74 = dma.vmem_to_hbm [thread:$0]  %s72, 128, %s2, [#allocation3]
    $region13: #{tpu_custom_call.1} parent=1 // pred_fallthru
      _
    // Predicated region
    $region14: #{tpu_custom_call.1} parent=1 // pred_check
      _
    $region15: #{tpu_custom_call.1} parent=1 // pred_check_branch
      %76 = sbr.rel (0) target = $region17
    $region16: #{tpu_custom_call.1} parent=1 // pred_region
      %77 = dma.done [#allocation3], 128
    $region17: #{tpu_custom_call.1} parent=1 // pred_fallthru
      _
    %78 = vsyncpa [#allocation3], 1

</llo_original>
